<compile_context>
chip_gen: v7x
topology: tpu7x:2x2x1
jax: 0.10.0
libtpu: 0.0.40
codegen_flags: <defaults>
</compile_context>

<pallas_src>
import math

import jax
import jax.numpy as jnp
from jax.experimental import pallas as pl
from jax.experimental.pallas import tpu as pltpu


# ----------------------------------------------------------------------------
# helpers
# ----------------------------------------------------------------------------
def _round_up(x, m):
    return (x + m - 1) // m * m


def _vmem_cap_bytes():
    try:
        return pltpu.get_tpu_info().vmem_capacity_bytes
    except Exception:
        return 64 * 2 ** 20  # conservative (v7x per-TensorCore VMEM)


def _default_block_rows():
    # Bigger row tiles amortize the ~0.35 us per-grid-step overhead; v7x (64 MiB VMEM
    # per TensorCore) needs a smaller tile than v5e/v6e (128 MiB).
    return 512 if _vmem_cap_bytes() >= 128 * 2 ** 20 else 256


def _vmem_limit_bytes(tm, tv, d, in_itemsize):
    # Size the scoped-VMEM limit from the actual tiles (+2x headroom) instead of
    # relying on the 16/32 MiB defaults.
    est = (2 * tm * d * in_itemsize        # x tile (double buffered, bf16)
           + 2 * d * tv * in_itemsize      # weight tile (double buffered, bf16)
           + 2 * tv * 4                    # bias tile
           + 2 * tm * tv * 4               # logits / output tile (f32)
           + 4 * tm * 4                    # lse output + (m, s) scratch
           + 4 * tm * tv * 4)              # f32 elementwise intermediates
    cap = _vmem_cap_bytes()
    return int(min(max(2 * est, 32 * 2 ** 20), cap - 8 * 2 ** 20))


# ----------------------------------------------------------------------------
# Kernels
# ----------------------------------------------------------------------------
def _fused_kernel(x_ref, w_ref, b_ref, out_ref):
    """Small-vocab path: one row tile, whole (padded) vocab resident.

      x_ref  : (TM, D)  bf16 tokens      w_ref: (D, Vp) bf16 weight (transposed)
      b_ref  : (1, Vp)  f32 bias (-1e30 in padded columns)
      out_ref: (TM, Vp) log-probabilities
    """
    z = jnp.dot(x_ref[...], w_ref[...],
                preferred_element_type=jnp.float32) + b_ref[...]   # MXU, f32 acc
    m = jnp.max(z, axis=-1, keepdims=True)                         # XLU reduce
    zs = z - m
    s = jnp.sum(jnp.exp(zs), axis=-1, keepdims=True)               # EUP exp + XLU
    out_ref[...] = (zs - jnp.log(s)).astype(out_ref.dtype)


def _logits_lse_kernel(x_ref, w_ref, b_ref, z_ref, lse_ref, m_sc, s_sc):
    """Large-vocab pass 1: raw logits per (row, vocab) tile + online softmax stats.

    Maintains running max / sum-of-exp in VMEM scratch across the vocab grid axis
    and emits log-sum-exp for the whole row at the last vocab step.
    """
    j = pl.program_id(1)

    @pl.when(j == 0)
    def _():
        m_sc[...] = jnp.full_like(m_sc, -jnp.inf)
        s_sc[...] = jnp.zeros_like(s_sc)

    z = jnp.dot(x_ref[...], w_ref[...],
                preferred_element_type=jnp.float32) + b_ref[...]
    z_ref[...] = z

    m_prev = m_sc[...]
    m_new = jnp.maximum(m_prev, jnp.max(z, axis=-1, keepdims=True))
    s_sc[...] = (s_sc[...] * jnp.exp(m_prev - m_new)
                 + jnp.sum(jnp.exp(z - m_new), axis=-1, keepdims=True))
    m_sc[...] = m_new

    @pl.when(j == pl.num_programs(1) - 1)
    def _():
        lse_ref[...] = m_sc[...] + jnp.log(s_sc[...])


def _normalize_kernel(z_ref, lse_ref, out_ref):
    """Large-vocab pass 2: log_softmax = z - logsumexp (lane-dense stores)."""
    out_ref[...] = (z_ref[...] - lse_ref[...]).astype(out_ref.dtype)


# ----------------------------------------------------------------------------
# Parameters
# ----------------------------------------------------------------------------
def init_params(key, *, d_model, vocab):
    """PyTorch nn.Linear(d_model, vocab): weight (vocab, d_model), bias (vocab,)."""
    kw, kb = jax.random.split(key, 2)
    bound = 1.0 / math.sqrt(d_model)
    return {
        "w": jax.random.uniform(kw, (vocab, d_model), jnp.float32, -bound, bound),
        "b": jax.random.uniform(kb, (vocab,), jnp.float32, -bound, bound),
    }


def prepare_params(params, *, vocab_block=2048, compute_dtype=jnp.bfloat16):
    """One-time preprocessing hoisted out of the per-call forward.

    * transpose weight to (d_model, Vp) and cast the MXU operand to bf16,
    * pad vocab to a multiple of the vocab tile (itself a multiple of 256 so
      v6e/v7x MXUs run at full column width; still 128-aligned for v5e),
    * padded bias columns hold -1e30 (f32) so they contribute ~0 to the softmax
      normalizer; the wrapper slices them off.
    """
    V, D = params["w"].shape
    tv = min(_round_up(V, 256), max(256, _round_up(vocab_block, 256)))
    vp = _round_up(V, tv)
    w_t = jnp.zeros((D, vp), compute_dtype).at[:, :V].set(
        params["w"].astype(compute_dtype).T)
    b_p = jnp.full((1, vp), -1e30, jnp.float32).at[0, :V].set(
        params["b"].astype(jnp.float32))
    return {"w_t": w_t, "b_p": b_p, "vocab": V, "vocab_block": tv}


# ----------------------------------------------------------------------------
# Forward
# ----------------------------------------------------------------------------
def generator_forward(prep, x, *, block_rows=None, out_dtype=jnp.float32):
    """x: (..., d_model) -> log_softmax(x @ W^T + b, axis=-1): (..., vocab)."""
    orig_shape = x.shape
    D = orig_shape[-1]
    V = prep["vocab"]
    w_t, b_p = prep["w_t"], prep["b_p"]
    Vp = w_t.shape[1]
    TV = prep["vocab_block"]
    nv = Vp // TV

    x2 = x.reshape(-1, D).astype(w_t.dtype)      # bf16 MXU operand (f32 accumulate)
    M = x2.shape[0]

    # Row tile: multiple of 8, no host-side padding (Pallas masks the ragged last
    # block); keep >=2 row tiles so the "parallel" axis feeds both v7x TensorCores.
    if block_rows is None:
        block_rows = _default_block_rows()
    TM = _round_up(min(block_rows, _round_up(M, 8)), 8)
    if pl.cdiv(M, TM) < 2 and M > 8:
        TM = _round_up(pl.cdiv(M, 2), 8)
    nr = pl.cdiv(M, TM)

    vmem_limit = _vmem_limit_bytes(TM, TV, D, x2.dtype.itemsize)

    if nv == 1:
        # Small vocab: single vocab tile -> fully fused kernel, one output write.
        out = pl.pallas_call(
            _fused_kernel,
            out_shape=jax.ShapeDtypeStruct((M, Vp), out_dtype),
            grid=(nr,),
            in_specs=[
                pl.BlockSpec((TM, D), lambda i: (i, 0)),   # tokens: tiled over rows
                pl.BlockSpec((D, Vp), lambda i: (0, 0)),   # weight: resident in VMEM
                pl.BlockSpec((1, Vp), lambda i: (0, 0)),   # bias:   resident in VMEM
            ],
            out_specs=pl.BlockSpec((TM, Vp), lambda i: (i, 0)),
            compiler_params=pltpu.CompilerParams(
                dimension_semantics=("parallel",),
                vmem_limit_bytes=vmem_limit),
        )(x2, w_t, b_p)
    else:
        # Large vocab: tile the vocab axis so VMEM stays bounded.
        # Pass 1: raw logits + per-row log-sum-exp via online max/sum-exp.
        z, lse = pl.pallas_call(
            _logits_lse_kernel,
            out_shape=(jax.ShapeDtypeStruct((M, Vp), jnp.float32),
                       jax.ShapeDtypeStruct((M, 1), jnp.float32)),
            grid=(nr, nv),
            in_specs=[
                pl.BlockSpec((TM, D), lambda i, j: (i, 0)),
                pl.BlockSpec((D, TV), lambda i, j: (0, j)),
                pl.BlockSpec((1, TV), lambda i, j: (0, j)),
            ],
            out_specs=(pl.BlockSpec((TM, TV), lambda i, j: (i, j)),
                       pl.BlockSpec((TM, 1), lambda i, j: (i, 0))),
            scratch_shapes=[pltpu.VMEM((TM, 1), jnp.float32),
                            pltpu.VMEM((TM, 1), jnp.float32)],
            compiler_params=pltpu.CompilerParams(
                dimension_semantics=("parallel", "arbitrary"),
                vmem_limit_bytes=vmem_limit),
        )(x2, w_t, b_p)

        # Pass 2: log_softmax = z - lse (trivially parallel, lane-dense stores).
        out = pl.pallas_call(
            _normalize_kernel,
            out_shape=jax.ShapeDtypeStruct((M, Vp), out_dtype),
            grid=(nr, nv),
            in_specs=[
                pl.BlockSpec((TM, TV), lambda i, j: (i, j)),
                pl.BlockSpec((TM, 1), lambda i, j: (i, 0)),
            ],
            out_specs=pl.BlockSpec((TM, TV), lambda i, j: (i, j)),
            compiler_params=pltpu.CompilerParams(
                dimension_semantics=("parallel", "parallel"),
                vmem_limit_bytes=vmem_limit),
        )(z, lse)

    # TODO(synk): for training, fuse the target-token gather / NLL loss downstream of
    # pass 1 so the full (M, V) log-prob matrix never has to be written to HBM.
    return out[:, :V].reshape(*orig_shape[:-1], V)


# ----------------------------------------------------------------------------
# Demo / self-check
# ----------------------------------------------------------------------------
if __name__ == "__main__":
    key = jax.random.PRNGKey(0)
    k1, k2, k3, k4 = jax.random.split(key, 4)

    # ---- test 1: module demo shapes (batch=2, seq=8, d_model=32, vocab=128) ----
    B, T, D_MODEL, VOCAB = 2, 8, 32, 128
    x = jax.random.normal(k1, (B, T, D_MODEL), jnp.float32)
    params = init_params(k2, d_model=D_MODEL, vocab=VOCAB)
    prep = prepare_params(params)                      # single vocab tile -> fused path
    out = generator_forward(prep, x)
    jax.block_until_ready(out)
    assert out.shape == (B, T, VOCAB)

    # tight reference: same bf16-rounded operands, true-f32 matmul, f32 softmax
    xb = x.astype(jnp.bfloat16).astype(jnp.float32)
    wb = params["w"].astype(jnp.bfloat16).astype(jnp.float32)
    ref_tight = jax.nn.log_softmax(
        jnp.dot(xb, wb.T, precision=jax.lax.Precision.HIGHEST) + params["b"], axis=-1)
    err = float(jnp.max(jnp.abs(out - ref_tight)))
    assert jnp.allclose(out, ref_tight, atol=2e-3, rtol=2e-3), err

    # loose semantic check vs. the pure-f32 PyTorch-equivalent reference
    ref_f32 = jax.nn.log_softmax(x @ params["w"].T + params["b"], axis=-1)
    assert jnp.allclose(out, ref_f32, atol=1e-1, rtol=0), \
        float(jnp.max(jnp.abs(out - ref_f32)))

    # ---- test 2: vocab-tiled online-softmax path (ragged row tile as well) ----
    B2, T2, D2, V2 = 2, 7, 32, 640
    x_big = jax.random.normal(k3, (B2, T2, D2), jnp.float32)
    params2 = init_params(k4, d_model=D2, vocab=V2)
    prep2 = prepare_params(params2, vocab_block=256)   # -> 3 vocab tiles
    out2 = generator_forward(prep2, x_big)
    jax.block_until_ready(out2)
    assert out2.shape == (B2, T2, V2)

    xb2 = x_big.astype(jnp.bfloat16).astype(jnp.float32)
    wb2 = params2["w"].astype(jnp.bfloat16).astype(jnp.float32)
    ref2 = jax.nn.log_softmax(
        jnp.dot(xb2, wb2.T, precision=jax.lax.Precision.HIGHEST) + params2["b"], axis=-1)
    err2 = float(jnp.max(jnp.abs(out2 - ref2)))
    assert jnp.allclose(out2, ref2, atol=2e-3, rtol=2e-3), err2

    print("KERNEL_OK")
</pallas_src>

<mosaic_0001>
module attributes {stable_mosaic.version = 11 : i64} {
  func.func @_fused_kernel(%arg0: i32, %arg1: memref<8x32xbf16, #tpu.memory_space<vmem>>, %arg2: memref<32x256xbf16, #tpu.memory_space<vmem>>, %arg3: memref<1x256xf32, #tpu.memory_space<vmem>>, %arg4: memref<8x256xf32, #tpu.memory_space<vmem>>) attributes {dimension_semantics = [#tpu.dimension_semantics<parallel>], iteration_bounds = array<i64: 2>, scalar_prefetch = 0 : i64, scratch_operands = 0 : i64, tpu.core_type = #tpu.core_type<tc>, window_params = [{transform_indices = @transform_0, window_bounds = array<i64: 8, 32>}, {pipeline_mode = #tpu.pipeline_mode<synchronous>, transform_indices = @transform_1, window_bounds = array<i64: 32, 256>}, {pipeline_mode = #tpu.pipeline_mode<synchronous>, transform_indices = @transform_2, window_bounds = array<i64: 1, 256>}, {transform_indices = @transform_3, window_bounds = array<i64: 8, 256>}]} {
    %c0 = arith.constant 0 : index
    %c0_0 = arith.constant 0 : index
    %0 = vector.load %arg1[%c0, %c0_0] : memref<8x32xbf16, #tpu.memory_space<vmem>>, vector<8x32xbf16>
    %c0_1 = arith.constant 0 : index
    %c0_2 = arith.constant 0 : index
    %1 = vector.load %arg2[%c0_1, %c0_2] : memref<32x256xbf16, #tpu.memory_space<vmem>>, vector<32x256xbf16>
    %cst = arith.constant dense<0.000000e+00> : vector<8x256xf32>
    %2 = tpu.matmul %0, %1, %cst {dimension_numbers = #tpu.dot_dimension_numbers<[1], [0], [0], [1], [0, 0, 1, 1], [], []>} : vector<8x32xbf16>, vector<32x256xbf16>, vector<8x256xf32> -> vector<8x256xf32>
    %c0_3 = arith.constant 0 : index
    %c0_4 = arith.constant 0 : index
    %3 = vector.load %arg3[%c0_3, %c0_4] : memref<1x256xf32, #tpu.memory_space<vmem>>, vector<1x256xf32>
    %4 = vector.broadcast %3 : vector<1x256xf32> to vector<8x256xf32>
    %5 = arith.addf %2, %4 : vector<8x256xf32>
    %cst_5 = arith.constant dense<0xFF800000> : vector<8xf32>
    %6 = vector.multi_reduction <maximumf>, %5, %cst_5 [1] : vector<8x256xf32> to vector<8xf32>
    %7 = vector.shape_cast %6 : vector<8xf32> to vector<8x1xf32>
    %8 = vector.broadcast %7 : vector<8x1xf32> to vector<8x256xf32>
    %9 = arith.subf %5, %8 : vector<8x256xf32>
    %10 = math.exp %9 : vector<8x256xf32>
    %cst_6 = arith.constant dense<0.000000e+00> : vector<8xf32>
    %11 = vector.multi_reduction <add>, %10, %cst_6 [1] : vector<8x256xf32> to vector<8xf32>
    %12 = vector.shape_cast %11 : vector<8xf32> to vector<8x1xf32>
    %13 = math.log %12 : vector<8x1xf32>
    %14 = vector.broadcast %13 : vector<8x1xf32> to vector<8x256xf32>
    %15 = arith.subf %9, %14 : vector<8x256xf32>
    %c0_7 = arith.constant 0 : index
    %c0_8 = arith.constant 0 : index
    %16 = vector.load %arg4[%c0_7, %c0_8] : memref<8x256xf32, #tpu.memory_space<vmem>>, vector<8x256xf32>
    tpu.vector_store %arg4[%c0_7, %c0_8], %15 {strides = array<i32>} : memref<8x256xf32, #tpu.memory_space<vmem>>, vector<8x256xf32>,
    return
  }
  func.func @transform_0(%arg0: i32) -> (i32, i32) {
    %c0_i32 = arith.constant 0 : i32
    %c0_i32_0 = arith.constant 0 : i32
    return %arg0, %c0_i32 : i32, i32
  }
  func.func @transform_1(%arg0: i32) -> (i32, i32) {
    %c0_i32 = arith.constant 0 : i32
    %c0_i32_0 = arith.constant 0 : i32
    %c0_i32_1 = arith.constant 0 : i32
    return %c0_i32, %c0_i32_0 : i32, i32
  }
  func.func @transform_2(%arg0: i32) -> (i32, i32) {
    %c0_i32 = arith.constant 0 : i32
    %c0_i32_0 = arith.constant 0 : i32
    %c0_i32_1 = arith.constant 0 : i32
    return %c0_i32, %c0_i32_0 : i32, i32
  }
  func.func @transform_3(%arg0: i32) -> (i32, i32) {
    %c0_i32 = arith.constant 0 : i32
    %c0_i32_0 = arith.constant 0 : i32
    return %arg0, %c0_i32 : i32, i32
  }
}

</mosaic_0001>

<llo_original>
// kernel: tpu_custom_call.1
$region0: #{tpu_custom_call.1}
  #allocation0 [shape = 'u32[]', space=smem, size = 0x4, offset = 0x4, fixed_abs, tag = 'smem constant byte address 0x4 - core index']
  #allocation1 [shape = 'u32[144,128]{1,0:T(1,128)}', space=vmem, size = 0x12000, scoped, tag = 'internal scratch']
  %s0 = inlined_call_operand.hbm [shape: bf16[16,32], index: 0, kind: input, shape index: {}]
  %s1 = inlined_call_operand.hbm [shape: bf16[32,256], index: 1, kind: input, shape index: {}]
  %s2 = inlined_call_operand.vmem [shape: f32[1,256], index: 2, kind: input, shape index: {}]
  %s3 = inlined_call_operand.hbm [shape: f32[16,256], index: 3, kind: output, shape index: {}]
  %s4 = sld [smem:[#allocation0]]
  $region53: #{tpu_custom_call.1} parent=0
    _
  %s6 = ssub.s32 1, %s4
  %s7 = scalar_select 0, %s6, %s4
  $region1: #{tpu_custom_call.1} parent=0
    #allocation2 [shape = 'u8[4096]{0}', space=vmem, size = 0x1000, scoped, tag = 'input window, operand 0']
    #allocation3 [shape = 's32[2]{0}', space=sflag, size = 0x8, scoped, tag = 'scoped memory for tpu_custom_call.1']
    #allocation4 [shape = 's32[2]{0}', space=sflag, size = 0x8, scoped, tag = 'scoped memory for tpu_custom_call.1']
    #allocation5 [shape = 'u8[16384]{0}', space=vmem, size = 0x4000, scoped, tag = 'input window, operand 1, single buffered']
    #allocation6 [shape = 's32[1]{0}', space=sflag, size = 0x4, scoped, tag = 'scoped memory for tpu_custom_call.1']
    #allocation7 [shape = 'u8[16384]{0}', space=vmem, size = 0x4000, scoped, tag = 'output window, operand 0']
    %8 = vsyncpa [#allocation3], 0
    %s9 = scalar_lea.sflag [#allocation3], 1
    %10 = vsyncpa %s9, 0
    %11 = vsyncpa [#allocation6], 0
    %12 = vsyncpa [#allocation4], 0
    %s13 = scalar_lea.sflag [#allocation4], 1
    %14 = vsyncpa %s13, 0
    loop: start=0, step=1, limit=4
    $region2: #{tpu_custom_call.1} parent=1 // loop_pre_header
      _
    $region3: #{tpu_custom_call.1} parent=1 // loop_header
      %s16 = sphi 0, %s20
      %p17 = scmp.ge.s32.totalorder %s16, 4
      %s26 = sphi 0, %s28
      %s29 = sphi 0, %s26
      %s30 = sphi 0, %s29
      %s46 = sphi 0, %s30
      %s50 = sphi 0, %s50
      %s52 = sphi 0, %s50
      %s53 = sphi 0, %s52
      %s67 = sphi 0, %s53
      %s71 = sphi 0, %s71
      %s73 = sphi 0, %s71
      %s74 = sphi 0, %s73
      %s88 = sphi 0, %s74
      %s94 = sphi 0, %s96
      %s97 = sphi 0, %s94
      %s98 = sphi 0, %s97
      %s114 = sphi 0, %s98
    $region4: #{tpu_custom_call.1} parent=1 // loop_header_branch
      %19 = sbr.rel (%p17) target = $region8
    $region5: #{tpu_custom_call.1} parent=1 // loop_body
      %s21 = ssub.s32 %s16, 1
      %s22 = ssub.s32 %s16, 2
      %s23 = sadd.s32 %s16, 1
      %s24 = ssub.s32 %s16, %s23
      %p25 = scmp.eq.s32.totalorder %s24, 0
      %s27 = sadd.s32 %s26, 1
      %s28 = scalar_select %p25, %s26, %s27
      %p31 = pneg %p25
      %p32 = scmp.eq.s32.totalorder %s16, 1
      %p33 = por %p31, %p32
      %p34 = scmp.ne.s32.totalorder %s26, %s29
      %p35 = scmp.eq.s32.totalorder %s16, 0
      %p36 = por %p34, %p35
      %p37 = scmp.ne.s32.totalorder %s26, %s29
      %p38 = scmp.eq.s32.totalorder %s21, 1
      %p39 = por %p37, %p38
      %p40 = scmp.ne.s32.totalorder %s29, %s30
      %p41 = scmp.eq.s32.totalorder %s21, 0
      %p42 = por %p40, %p41
      %p43 = scmp.ne.s32.totalorder %s29, %s30
      %p44 = scmp.eq.s32.totalorder %s22, 1
      %p45 = por %p43, %p44
      %p47 = scmp.ne.s32.totalorder %s30, %s46
      %p48 = scmp.eq.s32.totalorder %s22, 0
      %p49 = por %p47, %p48
      %s51 = sadd.s32 %s50, 1
      %p54 = scmp.eq.s32.totalorder %s16, 1
      %p55 = scmp.ne.s32.totalorder %s50, %s52
      %p56 = scmp.eq.s32.totalorder %s16, 0
      %p57 = por %p55, %p56
      %p58 = scmp.ne.s32.totalorder %s50, %s52
      %p59 = scmp.eq.s32.totalorder %s21, 1
      %p60 = por %p58, %p59
      %p61 = scmp.ne.s32.totalorder %s52, %s53
      %p62 = scmp.eq.s32.totalorder %s21, 0
      %p63 = por %p61, %p62
      %p64 = scmp.ne.s32.totalorder %s52, %s53
      %p65 = scmp.eq.s32.totalorder %s22, 1
      %p66 = por %p64, %p65
      %p68 = scmp.ne.s32.totalorder %s53, %s67
      %p69 = scmp.eq.s32.totalorder %s22, 0
      %p70 = por %p68, %p69
      %s72 = sadd.s32 %s71, 1
      %p75 = scmp.eq.s32.totalorder %s16, 1
      %p76 = scmp.ne.s32.totalorder %s71, %s73
      %p77 = scmp.eq.s32.totalorder %s16, 0
      %p78 = por %p76, %p77
      %p79 = scmp.ne.s32.totalorder %s71, %s73
      %p80 = scmp.eq.s32.totalorder %s21, 1
      %p81 = por %p79, %p80
      %p82 = scmp.ne.s32.totalorder %s73, %s74
      %p83 = scmp.eq.s32.totalorder %s21, 0
      %p84 = por %p82, %p83
      %p85 = scmp.ne.s32.totalorder %s73, %s74
      %p86 = scmp.eq.s32.totalorder %s22, 1
      %p87 = por %p85, %p86
      %p89 = scmp.ne.s32.totalorder %s74, %s88
      %p90 = scmp.eq.s32.totalorder %s22, 0
      %p91 = por %p89, %p90
      %s92 = ssub.s32 %s16, %s23
      %p93 = scmp.eq.s32.totalorder %s92, 0
      %s95 = sadd.s32 %s94, 1
      %s96 = scalar_select %p93, %s94, %s95
      %p99 = pneg %p93
      %p100 = scmp.eq.s32.totalorder %s16, 1
      %p101 = por %p99, %p100
      %p102 = scmp.ne.s32.totalorder %s94, %s97
      %p103 = scmp.eq.s32.totalorder %s16, 0
      %p104 = por %p102, %p103
      %p105 = scmp.ne.s32.totalorder %s94, %s97
      %p106 = scmp.eq.s32.totalorder %s21, 1
      %p107 = por %p105, %p106
      %p108 = scmp.ne.s32.totalorder %s97, %s98
      %p109 = scmp.eq.s32.totalorder %s21, 0
      %p110 = por %p108, %p109
      %p111 = scmp.ne.s32.totalorder %s97, %s98
      %p112 = scmp.eq.s32.totalorder %s22, 1
      %p113 = por %p111, %p112
      %p115 = scmp.ne.s32.totalorder %s98, %s114
      %p116 = scmp.eq.s32.totalorder %s22, 0
      %p117 = por %p115, %p116
      %p118 = scmp.le.s32.totalorder 1, %s16
      %p119 = scmp.lt.s32.totalorder %s16, 3
      %p120 = pnand %p118, %p119
      %p121 = pneg %p120
      // Predicated region
      $region9: #{tpu_custom_call.1} parent=5 // pred_check
        _
      $region10: #{tpu_custom_call.1} parent=5 // pred_check_branch
        %123 = sbr.rel (%p120) target = $region12
      $region11: #{tpu_custom_call.1} parent=5 // pred_region
        %s124 = ssub.s32 %s16, 1
        // Predicated region
        $region13: #{tpu_custom_call.1} parent=11 // pred_check
          %p125 = pneg %p63
        $region14: #{tpu_custom_call.1} parent=11 // pred_check_branch
          %127 = sbr.rel (%p125) target = $region16
        $region15: #{tpu_custom_call.1} parent=11 // pred_region
          %s129 = ssub.s32 512, 512
          %130 = vsyncadd [#allocation6], %s129
          %s131 = sshll.u32 [#allocation5], 4
          %s132 = int_to_ptr.vmem [resolvable:$true] %s131
          %137 = dma.hbm_to_vmem [thread:$0]  %s1, 512, %s132, [#allocation6], 128, 128, 8
        $region16: #{tpu_custom_call.1} parent=11 // pred_fallthru
          _
        // Predicated region
        $region17: #{tpu_custom_call.1} parent=11 // pred_check
          %p138 = pneg %p84
        $region18: #{tpu_custom_call.1} parent=11 // pred_check_branch
          %140 = sbr.rel (%p138) target = $region20
        $region19: #{tpu_custom_call.1} parent=11 // pred_region
          _
        $region20: #{tpu_custom_call.1} parent=11 // pred_fallthru
          _
      $region12: #{tpu_custom_call.1} parent=5 // pred_fallthru
        _
      %p141 = scmp.lt.s32.totalorder %s16, 2
      // Predicated region
      $region21: #{tpu_custom_call.1} parent=5 // pred_check
        %p142 = pneg %p141
      $region22: #{tpu_custom_call.1} parent=5 // pred_check_branch
        %144 = sbr.rel (%p142) target = $region24
      $region23: #{tpu_custom_call.1} parent=5 // pred_region
        // Predicated region
        $region25: #{tpu_custom_call.1} parent=23 // pred_check
          %p145 = pneg %p36
        $region26: #{tpu_custom_call.1} parent=23 // pred_check_branch
          %147 = sbr.rel (%p145) target = $region28
        $region27: #{tpu_custom_call.1} parent=23 // pred_region
          %s148 = sand.u32 %s26, 1
          %s149 = scalar_lea.sflag [#allocation3], %s148
          %s150 = sand.u32 %s26, 1
          %s151 = smul.addr %s150, 4
          %s152 = scalar_lea.vmem [#allocation2], %s151
          %s154 = ssub.s32 64, 64
          %155 = vsyncadd %s149, %s154
          %s156 = smul.addr %s16, 64
          %s157 = scalar_lea.hbm %s0, %s156
          %s159 = sshll.u32 %s152, 4
          %s160 = int_to_ptr.vmem [resolvable:$true] %s159
          %162 = dma.hbm_to_vmem [thread:$0]  %s157, 64, %s160, %s149
        $region28: #{tpu_custom_call.1} parent=23 // pred_fallthru
          _
      $region24: #{tpu_custom_call.1} parent=5 // pred_fallthru
        _
      %p163 = scmp.le.s32.totalorder 1, %s16
      %p164 = scmp.lt.s32.totalorder %s16, 3
      %p165 = pnand %p163, %p164
      %p166 = pneg %p165
      // Predicated region
      $region29: #{tpu_custom_call.1} parent=5 // pred_check
        _
      $region30: #{tpu_custom_call.1} parent=5 // pred_check_branch
        %168 = sbr.rel (%p165) target = $region32
      $region31: #{tpu_custom_call.1} parent=5 // pred_region
        %s169 = ssub.s32 %s16, 1
        %s170 = sand.u32 %s29, 1
        %s171 = scalar_lea.sflag [#allocation3], %s170
        %s172 = sand.u32 %s29, 1
        %s173 = smul.addr %s172, 4
        %s174 = scalar_lea.vmem [#allocation2], %s173
        // Predicated region
        $region33: #{tpu_custom_call.1} parent=31 // pred_check
          %p175 = pneg %p42
        $region34: #{tpu_custom_call.1} parent=31 // pred_check_branch
          %177 = sbr.rel (%p175) target = $region36
        $region35: #{tpu_custom_call.1} parent=31 // pred_region
          %178 = dma.done %s171, 64
        $region36: #{tpu_custom_call.1} parent=31 // pred_fallthru
          _
        // Predicated region
        $region37: #{tpu_custom_call.1} parent=31 // pred_check
          %p179 = pneg %p63
        $region38: #{tpu_custom_call.1} parent=31 // pred_check_branch
          %181 = sbr.rel (%p179) target = $region40
        $region39: #{tpu_custom_call.1} parent=31 // pred_region
          %182 = dma.done [#allocation6], 512
        $region40: #{tpu_custom_call.1} parent=31 // pred_fallthru
          _
        %s183 = sand.u32 %s29, 1
        %s184 = scalar_lea.sflag [#allocation3], %s183
        %s185 = sand.u32 %s29, 1
        %s186 = smul.addr %s185, 4
        %s187 = scalar_lea.vmem [#allocation2], %s186
        %p188 = pneg %p42
        %p189 = pneg %p39
        %p190 = pneg %p63
        %p191 = pneg %p60
        %p192 = pneg %p84
        %p193 = pneg %p81
        %p194 = pneg %p110
        %p195 = pneg %p107
        %s196 = sand.u32 %s97, 1
        %s197 = scalar_lea.sflag [#allocation4], %s196
        %s198 = sand.u32 %s97, 1
        %s199 = smul.addr %s198, 16
        %s200 = scalar_lea.vmem [#allocation7], %s199
        %v202 = vld [vmem:[%s174] sm:$0xf]
        %v203 = vld [vmem:[#allocation5] sm:$0xff]
        %v204 = vld [vmem:[#allocation5 + $0x8] sm:$0xff]
        %v205 = vld [vmem:[#allocation5 + $0x10] sm:$0xff]
        %v206 = vld [vmem:[#allocation5 + $0x18] sm:$0xff]
        %v207 = vld [vmem:[%s2] sm:$0x3]
        %v209 = vlaneseq
        %v210 = vshrl.u32 %v209, 7
        %v211 = vsub.s32 0, %v210
        %v212 = vrot.slane %v207, %v211
        %v213 = vlaneseq
        %v214 = vshrl.u32 %v213, 7
        %v215 = vsub.s32 1, %v214
        %v216 = vrot.slane %v207, %v215
        %v223 = vunpack.c.l.b16 %v203
        %v224 = vunpack.c.h.b16 %v203
        %v225 = vunpack.c.l.b16 %v204
        %v226 = vunpack.c.h.b16 %v204
        %v227 = vunpack.c.l.b16 %v205
        %v228 = vunpack.c.h.b16 %v205
        %v229 = vunpack.c.l.b16 %v206
        %v230 = vunpack.c.h.b16 %v206
        %v231 = vpack.c.b16 %v225, %v223
        %v232 = vpack.c.b16 %v226, %v224
        %v233 = vpack.c.b16 %v229, %v227
        %v234 = vpack.c.b16 %v230, %v228
        %vm239 = vcmask 261120
        %v241 = vsel %vm239, %v202, 0
        %243 = vmatprep.subr.bf16.mxu0 %v232
        %244 = vmatpush1.bf16.msra.mxu0 %v231
        %245 = vmatprep.subr.bf16.mxu0 %v234
        %246 = vmatpush1.bf16.msra.mxu0 %v233
        %247 = vmatprep.subr.bf16.mxu0 0
        %248 = vmatpush1.bf16.msra.mxu0 0
        %249 = vmatprep.subr.bf16.mxu0 0
        %250 = vmatpush1.bf16.msra.mxu0 0
        %251 = vmatprep.subr.bf16.mxu0 0
        %252 = vmatpush1.bf16.msra.mxu0 0
        %253 = vmatprep.subr.bf16.mxu0 0
        %254 = vmatpush1.bf16.msra.mxu0 0
        %255 = vmatprep.subr.bf16.mxu0 0
        %256 = vmatpush1.bf16.msra.mxu0 0
        %257 = vmatprep.subr.bf16.mxu0 0
        %258 = vmatpush1.bf16.msra.mxu0 0
        %259 = vmatprep.subr.bf16.mxu0 0
        %260 = vmatpush1.bf16.msra.mxu0 0
        %261 = vmatprep.subr.bf16.mxu0 0
        %262 = vmatpush1.bf16.msra.mxu0 0
        %263 = vmatprep.subr.bf16.mxu0 0
        %264 = vmatpush1.bf16.msra.mxu0 0
        %265 = vmatprep.subr.bf16.mxu0 0
        %266 = vmatpush1.bf16.msra.mxu0 0
        %267 = vmatprep.subr.bf16.mxu0 0
        %268 = vmatpush1.bf16.msra.mxu0 0
        %269 = vmatprep.subr.bf16.mxu0 0
        %270 = vmatpush1.bf16.msra.mxu0 0
        %271 = vmatprep.subr.bf16.mxu0 0
        %272 = vmatpush1.bf16.msra.mxu0 0
        %273 = vmatprep.subr.bf16.mxu0 0
        %274 = vmatpush1.bf16.msra.mxu0 0
        %275 = vmatprep.mubr.bf16.mxu0 0
        %276 = vmatmul.mubr.bf16.gmra.mrb[0].mxu0 %v241
        %v277 = vpop.f32.mrb[0].mxu0
        %v278 = vadd.f32 %v212, %v277
        %v279 = vpop.f32.mrb[0].mxu0
        %v280 = vadd.f32 %v216, %v279
        %v281 = vpop.f32.mrb[0].mxu0
        %v282 = vpop.f32.mrb[0].mxu0
        %283 = vdwg.mxu0
        %v284 = vmax.f32 %v278, %v280
        %285 = vmax.xlane.f32.xlu0 %v284
        %v286 = vpop.xlane.xlu0 %285
        %v287 = vsub.f32 %v278, %v286
        %v288 = vsub.f32 %v280, %v286
        %v289 = vmul.f32 %v287, 1.442695
        %v290 = vpow.pop %v289
        %v291 = vmul.f32 %v288, 1.442695
        %v292 = vpow.pop %v291
        %v293 = vadd.f32 %v290, %v292
        %294 = vadd.xlane.f32.xlu0 %v293
        %v295 = vpop.xlane.xlu0 %294
        %v296 = vlog2.pop %v295
        %v297 = vmul.f32 %v296, 0.6931472
        %v298 = vsub.f32 %v287, %v297
        %v299 = vsub.f32 %v288, %v297
        %300 = vst [vmem:[%s200] sm:$0xff] %v298
        %301 = vst [vmem:[%s200 + $0x8] sm:$0xff] %v299
        %s302 = sand.u32 %s97, 1
        %s303 = scalar_lea.sflag [#allocation4], %s302
        %s304 = sand.u32 %s97, 1
        %s305 = smul.addr %s304, 16
        %s306 = scalar_lea.vmem [#allocation7], %s305
        // Predicated region
        $region41: #{tpu_custom_call.1} parent=31 // pred_check
          %p307 = pneg %p107
        $region42: #{tpu_custom_call.1} parent=31 // pred_check_branch
          %309 = sbr.rel (%p307) target = $region44
        $region43: #{tpu_custom_call.1} parent=31 // pred_region
          %s311 = ssub.s32 256, 256
          %312 = vsyncadd %s303, %s311
          %s313 = smul.addr %s21, 2
          %s314 = smul.addr %s313, 128
          %s315 = scalar_lea.hbm %s3, %s314
          %s317 = sshll.u32 %s306, 4
          %s318 = int_to_ptr.vmem [resolvable:$true] %s317
          %320 = dma.vmem_to_hbm [thread:$0]  %s318, 256, %s315, %s303
        $region44: #{tpu_custom_call.1} parent=31 // pred_fallthru
          _
      $region32: #{tpu_custom_call.1} parent=5 // pred_fallthru
        _
      %p321 = scmp.le.s32.totalorder 2, %s16
      // Predicated region
      $region45: #{tpu_custom_call.1} parent=5 // pred_check
        %p322 = pneg %p321
      $region46: #{tpu_custom_call.1} parent=5 // pred_check_branch
        %324 = sbr.rel (%p322) target = $region48
      $region47: #{tpu_custom_call.1} parent=5 // pred_region
        %s325 = ssub.s32 %s16, 2
        // Predicated region
        $region49: #{tpu_custom_call.1} parent=47 // pred_check
          %p326 = pneg %p113
        $region50: #{tpu_custom_call.1} parent=47 // pred_check_branch
          %328 = sbr.rel (%p326) target = $region52
        $region51: #{tpu_custom_call.1} parent=47 // pred_region
          %s329 = sand.u32 %s98, 1
          %s330 = scalar_lea.sflag [#allocation4], %s329
          %s331 = sand.u32 %s98, 1
          %s332 = smul.addr %s331, 16
          %s333 = scalar_lea.vmem [#allocation7], %s332
          %334 = dma.done %s330, 256
        $region52: #{tpu_custom_call.1} parent=47 // pred_fallthru
          _
      $region48: #{tpu_custom_call.1} parent=5 // pred_fallthru
        _
    $region6: #{tpu_custom_call.1} parent=1 // loop_footer
      %s20 = sadd.s32 1, %s16
    $region7: #{tpu_custom_call.1} parent=1 // loop_footer_branch
      %15 = sbr.rel target = $region3
    $region8: #{tpu_custom_call.1} parent=1 // loop_exit
      _
    %335 = vsyncpa [#allocation3], 1
    %s336 = scalar_lea.sflag [#allocation3], 1
    %337 = vsyncpa %s336, 1
    %338 = vsyncpa [#allocation6], 1
    %339 = vsyncpa [#allocation4], 1
    %s340 = scalar_lea.sflag [#allocation4], 1
    %341 = vsyncpa %s340, 1

</llo_original>
